<compile_context>
chip_gen: v6e
topology: v6e:2x2x1
jax: 0.10.0
libtpu: 0.0.40
codegen_flags: <defaults>
</compile_context>

<pallas_src>
import functools

import jax
import jax.numpy as jnp
from jax.experimental import pallas as pl
from jax.experimental.pallas import tpu as pltpu


_EPS = 1e-8


def _round_up(x, m):
    return ((x + m - 1) // m) * m


def _int_pow(x, n):
    """x**n for a static non-negative integer n via repeated squaring (VPU only)."""
    n = int(n)
    if n == 0:
        return jnp.ones_like(x)
    result = None
    base = x
    while n > 0:
        if n & 1:
            result = base if result is None else result * base
        n >>= 1
        if n:
            base = base * base
    return result


def _tile_loss(pred, tgt, scale, *, gamma_pos, gamma_neg, clip):
    """Elementwise asymmetric loss for one (tm, Cp) tile. All inputs f32."""
    # sigmoid via exp + reciprocal; together with the single log below this is
    # ~3 EUP ops / element (the pow is done on the VPU, see below).
    e = jnp.exp(-pred)
    p = pl.reciprocal(1.0 + e, approx=False)

    if clip is not None and clip > 0:
        pt_neg = jnp.minimum(1.0 - p + clip, 1.0)
    else:
        pt_neg = 1.0 - p
    pt = pt_neg * (1.0 - tgt) + p * tgt
    one_m_pt = 1.0 - pt

    gp_ok = float(gamma_pos).is_integer() and gamma_pos >= 0
    gn_ok = float(gamma_neg).is_integer() and gamma_neg >= 0
    if gp_ok and gn_ok:
        # Integer exponents (defaults 0 / 4): repeated squaring + select instead
        # of pow -> exp(g*log(x)) on the single-slot EUP; also removes the
        # 0 * log(0) = NaN edge case when pt == 1.
        w_pos = _int_pow(one_m_pt, gamma_pos)
        w_neg = _int_pow(one_m_pt, gamma_neg)
        asym_w = jnp.where(tgt > 0.5, w_pos, w_neg)
    else:
        # TODO(synk): non-integer gammas fall back to a tensor-exponent pow
        # (2 extra EUP transcendentals per element).
        gamma = gamma_pos * tgt + gamma_neg * (1.0 - tgt)
        asym_w = jnp.power(one_m_pt, gamma)

    loss = -jnp.log(jnp.maximum(pt, _EPS)) * asym_w
    return loss * scale


def _asym_elemwise_kernel(pred_ref, tgt_ref, mask_ref, w_ref, out_ref, *,
                          gamma_pos, gamma_neg, clip, loss_weight):
    pred = pred_ref[...].astype(jnp.float32)
    tgt = tgt_ref[...].astype(jnp.float32)
    # Combined ignore-mask * sample-weight * loss_weight scale: one broadcast,
    # one full-tile multiply applied to the loss.
    scale = mask_ref[...].astype(jnp.float32) * (w_ref[...] * loss_weight)
    loss = _tile_loss(pred, tgt, scale,
                      gamma_pos=gamma_pos, gamma_neg=gamma_neg, clip=clip)
    out_ref[...] = loss.astype(out_ref.dtype)


def _asym_reduce_kernel(pred_ref, tgt_ref, mask_ref, w_ref, out_ref, *,
                        gamma_pos, gamma_neg, clip, loss_weight):
    # Fused 'sum' reduction: scalar accumulator resident across the whole grid.
    @pl.when(pl.program_id(0) == 0)
    def _init():
        out_ref[...] = jnp.zeros_like(out_ref)

    pred = pred_ref[...].astype(jnp.float32)
    tgt = tgt_ref[...].astype(jnp.float32)
    scale = mask_ref[...].astype(jnp.float32) * (w_ref[...] * loss_weight)
    loss = _tile_loss(pred, tgt, scale,
                      gamma_pos=gamma_pos, gamma_neg=gamma_neg, clip=clip)
    out_ref[...] = out_ref[...] + jnp.sum(loss)


def _choose_row_tile(n, c_pad):
    """Largest row tile (multiple of 8, <=1024) keeping the per-stage block a few MiB.

    Per-element bytes per pipeline stage: pred f32(4) + target bf16(2) +
    mask bf16(2) + output f32(4) = 12 B; x2 for double buffering.  The ~16 MiB
    resident budget fits comfortably inside v7x's 32 MiB scoped VMEM as well as
    v5e/v6e.
    """
    bytes_per_row = c_pad * 12
    budget = 8 * 1024 * 1024  # per stage; x2 double-buffering ≈ 16 MiB resident
    tm = budget // (2 * bytes_per_row)
    tm = max(8, min(1024, (tm // 8) * 8))
    tm = min(tm, _round_up(n, 8))
    return tm


def asymmetric_loss_with_ignore(pred, target, valid_label_mask=None, weight=None,
                                gamma_pos=0.0, gamma_neg=4.0, clip=0.05,
                                reduction='none', avg_factor=None,
                                loss_weight=1.0):
    assert pred.shape == target.shape, 'pred and target should be in the same shape.'
    assert reduction in ('none', 'mean', 'sum')
    N, C = pred.shape

    if reduction != 'mean':
        avg_factor = None

    # Pad C to a lane-dense multiple of 128 and N to a multiple of the row tile.
    Cp = _round_up(C, 128)
    tm = _choose_row_tile(N, Cp)
    Np = _round_up(N, tm)

    pred_p = jnp.zeros((Np, Cp), pred.dtype).at[:N, :C].set(pred)
    # target / mask are {0,1}: ship them as bf16 to halve their HBM bytes.
    tgt_p = jnp.zeros((Np, Cp), jnp.bfloat16).at[:N, :C].set(
        target.astype(jnp.bfloat16))
    if valid_label_mask is None:
        mask_src = jnp.ones((N, C), jnp.bfloat16)
    else:
        mask_src = valid_label_mask.astype(jnp.bfloat16)
    # Padded rows/cols get mask = 0, so they contribute nothing (incl. reductions).
    mask_p = jnp.zeros((Np, Cp), jnp.bfloat16).at[:N, :C].set(mask_src)
    if weight is None:
        w_col = jnp.ones((N, 1), jnp.float32)
    else:
        assert weight.ndim == 1
        w_col = weight.astype(jnp.float32).reshape(N, 1)
    w_p = jnp.zeros((Np, 1), jnp.float32).at[:N, :].set(w_col)

    grid = (Np // tm,)
    in_specs = [
        pl.BlockSpec((tm, Cp), lambda i: (i, 0)),   # pred
        pl.BlockSpec((tm, Cp), lambda i: (i, 0)),   # target (bf16)
        pl.BlockSpec((tm, Cp), lambda i: (i, 0)),   # valid_label_mask (bf16)
        pl.BlockSpec((tm, 1), lambda i: (i, 0)),    # per-sample weight column
    ]
    kern_kwargs = dict(gamma_pos=float(gamma_pos), gamma_neg=float(gamma_neg),
                       clip=float(clip) if clip is not None else 0.0,
                       loss_weight=float(loss_weight))

    if reduction == 'none':
        out = pl.pallas_call(
            functools.partial(_asym_elemwise_kernel, **kern_kwargs),
            out_shape=jax.ShapeDtypeStruct((Np, Cp), pred.dtype),
            grid=grid,
            in_specs=in_specs,
            out_specs=pl.BlockSpec((tm, Cp), lambda i: (i, 0)),
            compiler_params=pltpu.CompilerParams(
                dimension_semantics=("parallel",),          # megacore on v7x
                vmem_limit_bytes=32 * 1024 * 1024),
        )(pred_p, tgt_p, mask_p, w_p)
        return out[:N, :C]

    # 'mean' / 'sum': fused in-kernel reduction -> no (N, C) loss written to HBM.
    total = pl.pallas_call(
        functools.partial(_asym_reduce_kernel, **kern_kwargs),
        out_shape=jax.ShapeDtypeStruct((1, 1), jnp.float32),
        grid=grid,
        in_specs=in_specs,
        out_specs=pl.BlockSpec((1, 1), lambda i: (0, 0)),
        compiler_params=pltpu.CompilerParams(
            dimension_semantics=("arbitrary",),              # sequential accumulate
            vmem_limit_bytes=32 * 1024 * 1024),
    )(pred_p, tgt_p, mask_p, w_p)[0, 0]

    if reduction == 'mean':
        return total / (N * C) if avg_factor is None else total / avg_factor
    return total


class AsymmetricLossWithIgnore:
    """JAX/Pallas port of the PyTorch AsymmetricLossWithIgnore module (forward)."""

    def __init__(self, gamma_pos=0.0, gamma_neg=4.0, clip=0.05,
                 reduction='none', loss_weight=1.0):
        self.gamma_pos = gamma_pos
        self.gamma_neg = gamma_neg
        self.clip = clip
        self.reduction = reduction
        self.loss_weight = loss_weight

    def __call__(self, pred, target, valid_label_mask=None, weight=None,
                 avg_factor=None, reduction_override=None):
        assert reduction_override in (None, 'none', 'mean', 'sum')
        reduction = reduction_override if reduction_override else self.reduction
        return asymmetric_loss_with_ignore(
            pred, target, valid_label_mask, weight,
            gamma_pos=self.gamma_pos, gamma_neg=self.gamma_neg, clip=self.clip,
            reduction=reduction, avg_factor=avg_factor,
            loss_weight=self.loss_weight)


def _reference(pred, target, mask, weight, gamma_pos, gamma_neg, clip,
               loss_weight, reduction='none', avg_factor=None):
    """Pure-JAX reference mirroring the PyTorch forward."""
    eps = 1e-8
    p = jax.nn.sigmoid(pred)
    t = target.astype(pred.dtype)
    if reduction != 'mean':
        avg_factor = None
    if clip is not None and clip > 0:
        pt = jnp.minimum(1.0 - p + clip, 1.0) * (1 - t) + p * t
    else:
        pt = (1.0 - p) * (1 - t) + p * t
    aw = jnp.power(1.0 - pt, gamma_pos * t + gamma_neg * (1 - t))
    loss = -jnp.log(jnp.maximum(pt, eps)) * aw
    if mask is not None:
        loss = loss * mask
    if weight is not None:
        loss = loss * weight.reshape(-1, 1)
    if reduction == 'mean':
        loss = jnp.mean(loss) if avg_factor is None else jnp.sum(loss) / avg_factor
    elif reduction == 'sum':
        loss = jnp.sum(loss)
    return loss_weight * loss


if __name__ == "__main__":
    key = jax.random.PRNGKey(0)
    k1, k2, k3, k4 = jax.random.split(key, 4)

    # Small multi-label batch; deliberately unaligned (N=10, C=20) to exercise
    # the row/lane padding path.
    N, C = 10, 20
    pred = jax.random.normal(k1, (N, C), jnp.float32)
    target = jax.random.bernoulli(k2, 0.3, (N, C)).astype(jnp.float32)
    valid_label_mask = jax.random.bernoulli(k3, 0.9, (N, C)).astype(jnp.float32)
    weight = jax.random.uniform(k4, (N,), jnp.float32, 0.5, 1.5)

    loss_mod = AsymmetricLossWithIgnore(gamma_pos=0.0, gamma_neg=4.0, clip=0.05,
                                        reduction='none', loss_weight=1.0)

    # reduction='none'
    out_none = jax.block_until_ready(
        loss_mod(pred, target, valid_label_mask=valid_label_mask, weight=weight))
    ref_none = _reference(pred, target, valid_label_mask, weight,
                          0.0, 4.0, 0.05, 1.0, reduction='none')
    assert out_none.shape == (N, C)
    assert jnp.allclose(out_none, ref_none, atol=2e-5, rtol=1e-5), "mismatch ('none')"

    # reduction='mean' (fused in-kernel reduction)
    out_mean = jax.block_until_ready(
        loss_mod(pred, target, valid_label_mask=valid_label_mask, weight=weight,
                 reduction_override='mean'))
    ref_mean = _reference(pred, target, valid_label_mask, weight,
                          0.0, 4.0, 0.05, 1.0, reduction='mean')
    assert jnp.allclose(out_mean, ref_mean, atol=1e-4, rtol=1e-5), "mismatch ('mean')"

    # reduction='sum' (fused in-kernel reduction)
    out_sum = jax.block_until_ready(
        loss_mod(pred, target, valid_label_mask=valid_label_mask, weight=weight,
                 reduction_override='sum'))
    ref_sum = _reference(pred, target, valid_label_mask, weight,
                         0.0, 4.0, 0.05, 1.0, reduction='sum')
    assert jnp.allclose(out_sum, ref_sum, atol=1e-3, rtol=1e-5), "mismatch ('sum')"

    # A second, lane-aligned shape without mask / weight.
    N2, C2 = 16, 128
    pred2 = jax.random.normal(k1, (N2, C2), jnp.float32)
    target2 = jax.random.bernoulli(k2, 0.5, (N2, C2)).astype(jnp.float32)
    out2 = jax.block_until_ready(asymmetric_loss_with_ignore(pred2, target2))
    ref2 = _reference(pred2, target2, None, None, 0.0, 4.0, 0.05, 1.0)
    assert jnp.allclose(out2, ref2, atol=2e-5, rtol=1e-5), "mismatch (aligned, no mask)"

    print("KERNEL_OK")
</pallas_src>

<mosaic_0001>
module attributes {stable_mosaic.version = 11 : i64} {
  func.func @_asym_elemwise_kernel(%arg0: i32, %arg1: memref<16x128xf32, #tpu.memory_space<vmem>>, %arg2: memref<16x128xbf16, #tpu.memory_space<vmem>>, %arg3: memref<16x128xbf16, #tpu.memory_space<vmem>>, %arg4: memref<16x1xf32, #tpu.memory_space<vmem>>, %arg5: memref<16x128xf32, #tpu.memory_space<vmem>>) attributes {dimension_semantics = [#tpu.dimension_semantics<parallel>], iteration_bounds = array<i64: 1>, scalar_prefetch = 0 : i64, scratch_operands = 0 : i64, tpu.core_type = #tpu.core_type<tc>, window_params = [{transform_indices = @transform_0, window_bounds = array<i64: 16, 128>}, {transform_indices = @transform_1, window_bounds = array<i64: 16, 128>}, {transform_indices = @transform_2, window_bounds = array<i64: 16, 128>}, {transform_indices = @transform_3, window_bounds = array<i64: 16, 1>}, {transform_indices = @transform_4, window_bounds = array<i64: 16, 128>}]} {
    %c0 = arith.constant 0 : index
    %c0_0 = arith.constant 0 : index
    %0 = vector.load %arg1[%c0, %c0_0] : memref<16x128xf32, #tpu.memory_space<vmem>>, vector<16x128xf32>
    %c0_1 = arith.constant 0 : index
    %c0_2 = arith.constant 0 : index
    %1 = vector.load %arg2[%c0_1, %c0_2] : memref<16x128xbf16, #tpu.memory_space<vmem>>, vector<16x128xbf16>
    %2 = arith.extf %1 : vector<16x128xbf16> to vector<16x128xf32>
    %c0_3 = arith.constant 0 : index
    %c0_4 = arith.constant 0 : index
    %3 = vector.load %arg3[%c0_3, %c0_4] : memref<16x128xbf16, #tpu.memory_space<vmem>>, vector<16x128xbf16>
    %4 = arith.extf %3 : vector<16x128xbf16> to vector<16x128xf32>
    %c0_5 = arith.constant 0 : index
    %c0_6 = arith.constant 0 : index
    %5 = vector.load %arg4[%c0_5, %c0_6] : memref<16x1xf32, #tpu.memory_space<vmem>>, vector<16x1xf32>
    %cst = arith.constant 1.000000e+00 : f32
    %6 = vector.broadcast %cst : f32 to vector<16x1xf32>
    %7 = arith.mulf %5, %6 : vector<16x1xf32>
    %8 = vector.broadcast %7 : vector<16x1xf32> to vector<16x128xf32>
    %9 = arith.mulf %4, %8 : vector<16x128xf32>
    %cst_7 = arith.constant 0.000000e+00 : f32
    %10 = vector.broadcast %cst_7 : f32 to vector<16x128xf32>
    %11 = arith.subf %10, %0 : vector<16x128xf32>
    %12 = math.exp %11 : vector<16x128xf32>
    %cst_8 = arith.constant 1.000000e+00 : f32
    %13 = vector.broadcast %cst_8 : f32 to vector<16x128xf32>
    %14 = arith.addf %13, %12 : vector<16x128xf32>
    %15 = tpu.reciprocal %14 : vector<16x128xf32> -> vector<16x128xf32>
    %cst_9 = arith.constant 1.000000e+00 : f32
    %16 = vector.broadcast %cst_9 : f32 to vector<16x128xf32>
    %17 = arith.subf %16, %15 : vector<16x128xf32>
    %cst_10 = arith.constant 5.000000e-02 : f32
    %18 = vector.broadcast %cst_10 : f32 to vector<16x128xf32>
    %19 = arith.addf %17, %18 : vector<16x128xf32>
    %cst_11 = arith.constant 1.000000e+00 : f32
    %20 = vector.broadcast %cst_11 : f32 to vector<16x128xf32>
    %21 = arith.minimumf %19, %20 : vector<16x128xf32>
    %cst_12 = arith.constant 1.000000e+00 : f32
    %22 = vector.broadcast %cst_12 : f32 to vector<16x128xf32>
    %23 = arith.subf %22, %2 : vector<16x128xf32>
    %24 = arith.mulf %21, %23 : vector<16x128xf32>
    %25 = arith.mulf %15, %2 : vector<16x128xf32>
    %26 = arith.addf %24, %25 : vector<16x128xf32>
    %cst_13 = arith.constant 1.000000e+00 : f32
    %27 = vector.broadcast %cst_13 : f32 to vector<16x128xf32>
    %28 = arith.subf %27, %26 : vector<16x128xf32>
    %cst_14 = arith.constant 1.000000e+00 : f32
    %29 = vector.broadcast %cst_14 : f32 to vector<16x128xf32>
    %30 = arith.mulf %28, %28 : vector<16x128xf32>
    %31 = arith.mulf %30, %30 : vector<16x128xf32>
    %cst_15 = arith.constant 5.000000e-01 : f32
    %32 = vector.broadcast %cst_15 : f32 to vector<16x128xf32>
    %33 = arith.cmpf ogt, %2, %32 : vector<16x128xf32>
    %34 = arith.select %33, %29, %31 : vector<16x128xi1>, vector<16x128xf32>
    %cst_16 = arith.constant 9.99999993E-9 : f32
    %35 = vector.broadcast %cst_16 : f32 to vector<16x128xf32>
    %36 = arith.maximumf %26, %35 : vector<16x128xf32>
    %37 = math.log %36 : vector<16x128xf32>
    %cst_17 = arith.constant 0.000000e+00 : f32
    %38 = vector.broadcast %cst_17 : f32 to vector<16x128xf32>
    %39 = arith.subf %38, %37 : vector<16x128xf32>
    %40 = arith.mulf %39, %34 : vector<16x128xf32>
    %41 = arith.mulf %40, %9 : vector<16x128xf32>
    %c0_18 = arith.constant 0 : index
    %c0_19 = arith.constant 0 : index
    %42 = vector.load %arg5[%c0_18, %c0_19] : memref<16x128xf32, #tpu.memory_space<vmem>>, vector<16x128xf32>
    tpu.vector_store %arg5[%c0_18, %c0_19], %41 {strides = array<i32>} : memref<16x128xf32, #tpu.memory_space<vmem>>, vector<16x128xf32>,
    return
  }
  func.func @transform_0(%arg0: i32) -> (i32, i32) {
    %c0_i32 = arith.constant 0 : i32
    %c0_i32_0 = arith.constant 0 : i32
    return %arg0, %c0_i32 : i32, i32
  }
  func.func @transform_1(%arg0: i32) -> (i32, i32) {
    %c0_i32 = arith.constant 0 : i32
    %c0_i32_0 = arith.constant 0 : i32
    return %arg0, %c0_i32 : i32, i32
  }
  func.func @transform_2(%arg0: i32) -> (i32, i32) {
    %c0_i32 = arith.constant 0 : i32
    %c0_i32_0 = arith.constant 0 : i32
    return %arg0, %c0_i32 : i32, i32
  }
  func.func @transform_3(%arg0: i32) -> (i32, i32) {
    %c0_i32 = arith.constant 0 : i32
    %c0_i32_0 = arith.constant 0 : i32
    return %arg0, %c0_i32 : i32, i32
  }
  func.func @transform_4(%arg0: i32) -> (i32, i32) {
    %c0_i32 = arith.constant 0 : i32
    %c0_i32_0 = arith.constant 0 : i32
    return %arg0, %c0_i32 : i32, i32
  }
}

</mosaic_0001>

<llo_original>
// kernel: tpu_custom_call.1
$region0: #{tpu_custom_call.1}
  #allocation0 [shape = 'u32[]', space=smem, size = 0x4, offset = 0x4, fixed_abs, tag = 'smem constant byte address 0x4 - core index']
  #allocation1 [shape = 'u32[144,128]{1,0:T(1,128)}', space=vmem, size = 0x12000, scoped, tag = 'internal scratch']
  %s0 = inlined_call_operand.vmem [shape: f32[16,128], index: 0, kind: input, shape index: {}]
  %s1 = inlined_call_operand.hbm [shape: bf16[16,128], index: 1, kind: input, shape index: {}]
  %s2 = inlined_call_operand.hbm [shape: bf16[16,128], index: 2, kind: input, shape index: {}]
  %s3 = inlined_call_operand.vmem [shape: f32[16,1], index: 3, kind: input, shape index: {}]
  %s4 = inlined_call_operand.hbm [shape: f32[16,128], index: 4, kind: output, shape index: {}]
  %s5 = sld [smem:[#allocation0]]
  $region34: #{tpu_custom_call.1} parent=0
    _
  %s7 = ssub.s32 1, %s5
  %s8 = scalar_select 0, %s7, %s5
  $region1: #{tpu_custom_call.1} parent=0
    #allocation2 [shape = 'u8[4096]{0}', space=vmem, size = 0x1000, scoped, tag = 'input window, operand 1, single buffered']
    #allocation3 [shape = 's32[1]{0}', space=sflag, size = 0x4, scoped, tag = 'scoped memory for tpu_custom_call.1']
    #allocation4 [shape = 's32[1]{0}', space=sflag, size = 0x4, scoped, tag = 'scoped memory for tpu_custom_call.1']
    #allocation5 [shape = 'u8[4096]{0}', space=vmem, size = 0x1000, scoped, tag = 'input window, operand 2, single buffered']
    #allocation6 [shape = 's32[1]{0}', space=sflag, size = 0x4, scoped, tag = 'scoped memory for tpu_custom_call.1']
    #allocation7 [shape = 'u8[8192]{0}', space=vmem, size = 0x2000, scoped, tag = 'output window, operand 0, single buffered']
    %9 = vsyncpa [#allocation3], 0
    %10 = vsyncpa [#allocation6], 0
    %11 = vsyncpa [#allocation4], 0
    // Predicated region
    $region2: #{tpu_custom_call.1} parent=1 // pred_check
      _
    $region3: #{tpu_custom_call.1} parent=1 // pred_check_branch
      %13 = sbr.rel (0) target = $region5
    $region4: #{tpu_custom_call.1} parent=1 // pred_region
      _
    $region5: #{tpu_custom_call.1} parent=1 // pred_fallthru
      _
    // Predicated region
    $region6: #{tpu_custom_call.1} parent=1 // pred_check
      _
    $region7: #{tpu_custom_call.1} parent=1 // pred_check_branch
      %15 = sbr.rel (0) target = $region9
    $region8: #{tpu_custom_call.1} parent=1 // pred_region
      %s17 = ssub.s32 128, 128
      %18 = vsyncadd [#allocation3], %s17
      %s19 = sshll.u32 [#allocation2], 4
      %s20 = int_to_ptr.vmem [resolvable:$true] %s19
      %25 = dma.hbm_to_vmem [thread:$0]  %s1, 128, %s20, [#allocation3], 64, 64, 4
    $region9: #{tpu_custom_call.1} parent=1 // pred_fallthru
      _
    // Predicated region
    $region10: #{tpu_custom_call.1} parent=1 // pred_check
      _
    $region11: #{tpu_custom_call.1} parent=1 // pred_check_branch
      %27 = sbr.rel (0) target = $region13
    $region12: #{tpu_custom_call.1} parent=1 // pred_region
      %s29 = ssub.s32 128, 128
      %30 = vsyncadd [#allocation6], %s29
      %s31 = sshll.u32 [#allocation5], 4
      %s32 = int_to_ptr.vmem [resolvable:$true] %s31
      %37 = dma.hbm_to_vmem [thread:$0]  %s2, 128, %s32, [#allocation6], 64, 64, 4
    $region13: #{tpu_custom_call.1} parent=1 // pred_fallthru
      _
    // Predicated region
    $region14: #{tpu_custom_call.1} parent=1 // pred_check
      _
    $region15: #{tpu_custom_call.1} parent=1 // pred_check_branch
      %39 = sbr.rel (0) target = $region17
    $region16: #{tpu_custom_call.1} parent=1 // pred_region
      _
    $region17: #{tpu_custom_call.1} parent=1 // pred_fallthru
      _
    // Predicated region
    $region18: #{tpu_custom_call.1} parent=1 // pred_check
      _
    $region19: #{tpu_custom_call.1} parent=1 // pred_check_branch
      %41 = sbr.rel (0) target = $region21
    $region20: #{tpu_custom_call.1} parent=1 // pred_region
      %42 = dma.done [#allocation3], 128
    $region21: #{tpu_custom_call.1} parent=1 // pred_fallthru
      _
    // Predicated region
    $region22: #{tpu_custom_call.1} parent=1 // pred_check
      _
    $region23: #{tpu_custom_call.1} parent=1 // pred_check_branch
      %44 = sbr.rel (0) target = $region25
    $region24: #{tpu_custom_call.1} parent=1 // pred_region
      %45 = dma.done [#allocation6], 128
    $region25: #{tpu_custom_call.1} parent=1 // pred_fallthru
      _
    %v46 = vld [vmem:[%s0] sm:$0xff]
    %v47 = vld [vmem:[%s0 + $0x8] sm:$0xff]
    %v48 = vld [vmem:[#allocation2] sm:$0xf]
    %v49 = vld [vmem:[#allocation2 + $0x4] sm:$0xf]
    %v50 = vunpack.c.l.bf16 %v48
    %v51 = vunpack.c.l.bf16 %v49
    %v52 = vld [vmem:[#allocation5] sm:$0xf]
    %v53 = vld [vmem:[#allocation5 + $0x4] sm:$0xf]
    %v54 = vunpack.c.l.bf16 %v52
    %v55 = vunpack.c.l.bf16 %v53
    %v56 = vld [vmem:[%s3] sm:$0xff]
    %v57 = vld [vmem:[%s3 + $0x8] sm:$0xff]
    %59 = vset.pattern.permute.xlu0 0
    %60 = vperm.xlu0 %59, %v56
    %v61 = vpop.permute.xlu0 %60
    %64 = vset.pattern.permute.xlu0 0
    %65 = vperm.xlu0 %64, %v57
    %v66 = vpop.permute.xlu0 %65
    %v68 = vmul.f32 %v54, %v61
    %v69 = vmul.f32 %v55, %v66
    %v70 = vsub.f32 0.0, %v46
    %v71 = vsub.f32 0.0, %v47
    %v72 = vmul.f32 %v70, 1.442695
    %v73 = vpow.pop %v72
    %v74 = vmul.f32 %v71, 1.442695
    %v75 = vpow.pop %v74
    %v76 = vadd.f32 %v73, 1.0
    %v77 = vadd.f32 %v75, 1.0
    %v78 = vrcp.pop %v76
    %v79 = vrcp.pop %v77
    %v80 = vsub.f32 1.0, %v78
    %v81 = vsub.f32 1.0, %v79
    %v82 = vadd.f32 %v80, 0.05
    %v83 = vadd.f32 %v81, 0.05
    %v84 = vmin.f32 %v82, 1.0
    %v85 = vmin.f32 %v83, 1.0
    %v86 = vsub.f32 1.0, %v50
    %v87 = vsub.f32 1.0, %v51
    %v88 = vmul.f32 %v84, %v86
    %v89 = vmul.f32 %v85, %v87
    %v90 = vmul.f32 %v78, %v50
    %v91 = vmul.f32 %v79, %v51
    %v92 = vadd.f32 %v88, %v90
    %v93 = vadd.f32 %v89, %v91
    %v94 = vsub.f32 1.0, %v92
    %v95 = vsub.f32 1.0, %v93
    %v96 = vmul.f32 %v94, %v94
    %v97 = vmul.f32 %v95, %v95
    %v98 = vmul.f32 %v96, %v96
    %v99 = vmul.f32 %v97, %v97
    %vm100 = vcmp.gt.f32.partialorder %v50, 0.5
    %vm101 = vcmp.gt.f32.partialorder %v51, 0.5
    %v102 = vsel %vm100, 1.0, %v98
    %v103 = vsel %vm101, 1.0, %v99
    %v104 = vmax.f32 %v92, 1e-08
    %v105 = vmax.f32 %v93, 1e-08
    %v106 = vlog2.pop %v104
    %v107 = vmul.f32 %v106, 0.6931472
    %v108 = vlog2.pop %v105
    %v109 = vmul.f32 %v108, 0.6931472
    %v110 = vsub.f32 0.0, %v107
    %v111 = vsub.f32 0.0, %v109
    %v112 = vmul.f32 %v110, %v102
    %v113 = vmul.f32 %v111, %v103
    %v114 = vmul.f32 %v112, %v68
    %v115 = vmul.f32 %v113, %v69
    %116 = vst [vmem:[#allocation7] sm:$0xff] %v114
    %117 = vst [vmem:[#allocation7 + $0x8] sm:$0xff] %v115
    // Predicated region
    $region26: #{tpu_custom_call.1} parent=1 // pred_check
      _
    $region27: #{tpu_custom_call.1} parent=1 // pred_check_branch
      %119 = sbr.rel (0) target = $region29
    $region28: #{tpu_custom_call.1} parent=1 // pred_region
      %s121 = ssub.s32 256, 256
      %122 = vsyncadd [#allocation4], %s121
      %s123 = sshll.u32 [#allocation7], 4
      %s124 = int_to_ptr.vmem [resolvable:$true] %s123
      %129 = dma.vmem_to_hbm [thread:$0]  %s124, 256, %s4, [#allocation4], 128, 128, 8
    $region29: #{tpu_custom_call.1} parent=1 // pred_fallthru
      _
    // Predicated region
    $region30: #{tpu_custom_call.1} parent=1 // pred_check
      _
    $region31: #{tpu_custom_call.1} parent=1 // pred_check_branch
      %131 = sbr.rel (0) target = $region33
    $region32: #{tpu_custom_call.1} parent=1 // pred_region
      %132 = dma.done [#allocation4], 256
    $region33: #{tpu_custom_call.1} parent=1 // pred_fallthru
      _
    %133 = vsyncpa [#allocation3], 1
    %134 = vsyncpa [#allocation6], 1
    %135 = vsyncpa [#allocation4], 1

</llo_original>
